<compile_context>
chip_gen: v7x
topology: tpu7x:2x2x1
jax: 0.10.0
libtpu: 0.0.40
codegen_flags: <defaults>
</compile_context>

<pallas_src>
import functools

import jax
import jax.numpy as jnp
from jax import lax
from jax.experimental import pallas as pl
from jax.experimental.pallas import tpu as pltpu


def _hint_aligned(idx, align):
    """Alignment hint for traced indices; pass-through for Python ints."""
    if isinstance(idx, int):
        return idx
    return pl.multiple_of(idx, align)


def _ntxent_kernel(z_i_ref, z_j_hbm, loss_ref,
                   zjn_ref, stage_ref, colsum_ref, acc_ref, dma_sem, *,
                   batch_size: int, tile_m: int, tile_n: int,
                   num_col_chunks: int, temperature: float, matmul_dtype):
    i = pl.program_id(0)
    inv_t = 1.0 / float(temperature)
    eps = 1e-12  # F.normalize default eps

    # ---------------------------------------------------------------- init --
    # Grid step 0 only: stream raw z_j from HBM chunk-by-chunk through a small
    # staging buffer (no pipeline double-buffer of the full array), normalize,
    # fold in 1/t, store once as matmul_dtype into the resident zjn scratch.
    # Safe because the grid axis is "arbitrary" (sequential).
    @pl.when(i == 0)
    def _init():
        def init_chunk(c, carry):
            start = _hint_aligned(c * tile_n, tile_n)
            cp = pltpu.make_async_copy(z_j_hbm.at[pl.ds(start, tile_n), :],
                                       stage_ref, dma_sem.at[0])
            cp.start()
            cp.wait()
            zj = stage_ref[...].astype(jnp.float32)
            ss = jnp.sum(zj * zj, axis=1, keepdims=True)
            # x * rsqrt(max(sumsq, eps^2)) == x / max(||x||, eps); the 1/t
            # scale is applied once here instead of per grid step.
            zjn = zj * (lax.rsqrt(jnp.maximum(ss, eps * eps)) * inv_t)
            zjn_ref[pl.ds(start, tile_n), :] = zjn.astype(matmul_dtype)
            return carry

        if num_col_chunks == 1:
            init_chunk(0, 0)
        else:
            lax.fori_loop(0, num_col_chunks, init_chunk, 0)
        colsum_ref[...] = jnp.zeros_like(colsum_ref)
        acc_ref[...] = jnp.zeros_like(acc_ref)

    # ----------------------------------------------------------- row tile i --
    zi = z_i_ref[...].astype(jnp.float32)
    ss = jnp.sum(zi * zi, axis=1, keepdims=True)
    zin = zi * lax.rsqrt(jnp.maximum(ss, eps * eps))        # f32 (VPU/EUP)
    zin_mm = zin.astype(matmul_dtype)                        # MXU operand

    # Positives = diag(sim_ij) for this tile's rows.  zjn already carries the
    # 1/t factor, so the loss term below is just -2 * pos.
    row_start = _hint_aligned(i * tile_m, tile_m)
    zjn_tile = zjn_ref[pl.ds(row_start, tile_m), :].astype(jnp.float32)
    pos = jnp.sum(zin * zjn_tile, axis=1, keepdims=True)     # (tile_m, 1) = sim_ii/t

    # Column-chunked cross block: sim / e stay (tile_m, tile_n).  Row sums are
    # carried through the loop; column sums accumulate into a per-chunk row of
    # the colsum scratch (f32 accumulation throughout).
    # No max-subtraction needed: |sim/t| <= 1/t, bounded for sane temperatures.
    def col_step(c, row_sum):
        cstart = _hint_aligned(c * tile_n, tile_n)
        zjn_chunk = zjn_ref[pl.ds(cstart, tile_n), :]         # (tile_n, D)
        sim = lax.dot_general(zin_mm, zjn_chunk,
                              (((1,), (1,)), ((), ())),
                              preferred_element_type=jnp.float32)  # already /t
        e = jnp.exp(sim)                                      # f32 EUP
        colsum_ref[pl.ds(c, 1), :] += jnp.sum(e, axis=0, keepdims=True)
        return row_sum + jnp.sum(e, axis=1, keepdims=True)

    zero_rowsum = jnp.zeros((tile_m, 1), jnp.float32)
    if num_col_chunks == 1:
        row_sum = col_step(0, zero_rowsum)
    else:
        row_sum = lax.fori_loop(0, num_col_chunks, col_step, zero_rowsum)

    # Log-space contribution: this tile's top-half rows + both halves' positive
    # terms (each positive pair appears twice in the 2B-row loss).
    acc_ref[...] += jnp.sum(jnp.log(row_sum) - 2.0 * pos, keepdims=True)

    @pl.when(i == pl.num_programs(0) - 1)
    def _finalize():
        total = jnp.sum(acc_ref[...]) + jnp.sum(jnp.log(colsum_ref[...]))
        loss_ref[0] = total / (2.0 * batch_size)


def _vmem_budget_bytes():
    cap = 64 * 1024 * 1024
    try:
        info = pltpu.get_tpu_info()
        cap = int(getattr(info, "vmem_capacity_bytes", cap))
    except Exception:
        pass
    # ~60% of physical VMEM: ~77 MiB on v5e/v6e (128 MiB), ~38 MiB on v7x (64 MiB).
    return max(32 * 1024 * 1024, min((cap * 3) // 5, 100 * 1024 * 1024))


def _choose_tiles(batch_size, dim, mm_bytes, in_bytes, vmem_budget):
    """Footprint-aware tile pick: largest row tile dividing B that fits."""
    def _divisors(cands):
        return [c for c in cands if c <= batch_size and batch_size % c == 0]

    tile_n = (_divisors((512, 256, 128)) or [batch_size])[0]
    tm_cands = _divisors((512, 256, 128, 64, 32, 16, 8)) or [batch_size]
    for tm in tm_cands:
        footprint = (batch_size * dim * mm_bytes        # resident normalized z_j
                     + tile_n * dim * in_bytes          # init DMA staging buffer
                     + 2 * tm * dim * in_bytes          # double-buffered z_i tile
                     + 3 * tm * tile_n * 4              # sim / e / reduce temporaries
                     + batch_size * 4 + (1 << 14))      # colsum + slack
        if footprint <= (vmem_budget * 4) // 5:
            return tm, tile_n
    return tm_cands[-1], tile_n


def ntxent_loss(z_i, z_j, temperature=0.5, matmul_dtype=jnp.bfloat16):
    """NT-Xent loss.  Default bf16 MXU path (native on v5e/v6e/v7x); pass
    matmul_dtype=jnp.float32 for strict precision."""
    assert z_i.shape == z_j.shape and z_i.ndim == 2
    B, D = z_i.shape
    matmul_dtype = jnp.dtype(matmul_dtype)
    budget = _vmem_budget_bytes()
    tile_m, tile_n = _choose_tiles(B, D, matmul_dtype.itemsize,
                                   jnp.dtype(z_i.dtype).itemsize, budget)
    num_tiles = B // tile_m
    num_col_chunks = B // tile_n

    kernel = functools.partial(
        _ntxent_kernel, batch_size=B, tile_m=tile_m, tile_n=tile_n,
        num_col_chunks=num_col_chunks, temperature=float(temperature),
        matmul_dtype=matmul_dtype)

    loss = pl.pallas_call(
        kernel,
        out_shape=jax.ShapeDtypeStruct((1,), jnp.float32),
        grid_spec=pltpu.PrefetchScalarGridSpec(
            num_scalar_prefetch=0,
            grid=(num_tiles,),
            in_specs=[
                pl.BlockSpec((tile_m, D), lambda i: (i, 0)),   # z_i row tile
                pl.BlockSpec(memory_space=pl.ANY),             # z_j stays in HBM
            ],
            out_specs=pl.BlockSpec(memory_space=pltpu.MemorySpace.SMEM),
            scratch_shapes=[
                pltpu.VMEM((B, D), matmul_dtype),                   # zjn (normalized, /t)
                pltpu.VMEM((tile_n, D), z_j.dtype),                 # init DMA staging
                pltpu.VMEM((num_col_chunks, tile_n), jnp.float32),  # column-sum acc
                pltpu.VMEM((1, 1), jnp.float32),                    # log-space acc
                pltpu.SemaphoreType.DMA((1,)),                      # init DMA sem
            ],
        ),
        compiler_params=pltpu.CompilerParams(
            dimension_semantics=("arbitrary",),   # colsum carry + one-time init
            vmem_limit_bytes=budget,
        ),
    )(z_i, z_j)
    return loss[0]


def _reference_loss(z_i, z_j, temperature=0.5):
    # Pure-JAX reference mirroring the PyTorch forward, for verification.
    B = z_i.shape[0]
    norm = lambda x: x / jnp.maximum(
        jnp.linalg.norm(x, axis=1, keepdims=True), 1e-12)
    reps = jnp.concatenate([norm(z_i), norm(z_j)], axis=0)
    sim = reps @ reps.T
    positives = jnp.concatenate([jnp.diag(sim, B), jnp.diag(sim, -B)], axis=0)
    mask = jnp.ones((2 * B, 2 * B), jnp.float32)
    mask = mask.at[:B, :B].set(0.0).at[B:, B:].set(0.0)
    denom = jnp.sum(mask * jnp.exp(sim / temperature), axis=1)
    loss_partial = -jnp.log(jnp.exp(positives / temperature) / denom)
    return jnp.sum(loss_partial) / (2 * B)


if __name__ == "__main__":
    B, D = 8, 32  # batch_size=8, embedding dim=32
    key = jax.random.PRNGKey(0)
    k1, k2 = jax.random.split(key)
    z_i = jax.random.normal(k1, (B, D), dtype=jnp.float32)
    z_j = jax.random.normal(k2, (B, D), dtype=jnp.float32)

    ref = _reference_loss(z_i, z_j, temperature=0.5)

    # Strict-precision path (f32 MXU) — tight check of the math.
    loss_f32 = ntxent_loss(z_i, z_j, temperature=0.5, matmul_dtype=jnp.float32)
    jax.block_until_ready(loss_f32)
    assert jnp.allclose(loss_f32, ref, rtol=1e-4, atol=1e-5), (loss_f32, ref)

    # Default path: bf16 MXU + bf16-resident zjn (recommended on v6e/v7x).
    loss = ntxent_loss(z_i, z_j, temperature=0.5)
    jax.block_until_ready(loss)
    assert jnp.allclose(loss, ref, rtol=2e-2, atol=2e-2), (loss, ref)

    print("KERNEL_OK")
</pallas_src>

<mosaic_0001>
module attributes {stable_mosaic.version = 11 : i64} {
  func.func @_ntxent_kernel(%arg0: i32, %arg1: memref<8x32xf32, #tpu.memory_space<vmem>>, %arg2: memref<8x32xf32, #tpu.memory_space<any>>, %arg3: memref<1xf32, #tpu.memory_space<smem>>, %arg4: memref<8x32xf32, #tpu.memory_space<vmem>>, %arg5: memref<8x32xf32, #tpu.memory_space<vmem>>, %arg6: memref<1x8xf32, #tpu.memory_space<vmem>>, %arg7: memref<1x1xf32, #tpu.memory_space<vmem>>, %arg8: memref<1x!tpu.dma_semaphore, #tpu.memory_space<semaphore_mem>>) attributes {dimension_semantics = [#tpu.dimension_semantics<arbitrary>], iteration_bounds = array<i64: 1>, scalar_prefetch = 0 : i64, scratch_operands = 5 : i64, tpu.core_type = #tpu.core_type<tc>, window_params = [{transform_indices = @transform_0, window_bounds = array<i64: 8, 32>}, {}, {transform_indices = @transform_2, window_bounds = array<i64: 1>}]} {
    %c0_i32 = arith.constant 0 : i32
    %0 = arith.cmpi eq, %arg0, %c0_i32 : i32
    %1 = arith.extui %0 : i1 to i32
    %c0_i32_0 = arith.constant 0 : i32
    %2 = arith.cmpi ne, %1, %c0_i32_0 : i32
    scf.if %2 {
      %c0_i32_23 = arith.constant 0 : i32
      %c0_i32_24 = arith.constant 0 : i32
      %c0_i32_25 = arith.constant 0 : i32
      %46 = tpu.memref_slice %arg2[%c0_i32_24, %c0_i32_25] : memref<8x32xf32, #tpu.memory_space<any>> -> memref<8x32xf32, #tpu.memory_space<any>>
      %47 = tpu.memref_slice %arg8[%c0_i32_23] : memref<1x!tpu.dma_semaphore, #tpu.memory_space<semaphore_mem>> -> memref<1x!tpu.dma_semaphore, #tpu.memory_space<semaphore_mem>>
      %48 = tpu.memref_squeeze %47 : memref<1x!tpu.dma_semaphore, #tpu.memory_space<semaphore_mem>> -> memref<!tpu.dma_semaphore, #tpu.memory_space<semaphore_mem>>
      tpu.enqueue_dma source(%46 : memref<8x32xf32, #tpu.memory_space<any>>) target(%arg5 : memref<8x32xf32, #tpu.memory_space<vmem>>) target_semaphore(%48 : memref<!tpu.dma_semaphore, #tpu.memory_space<semaphore_mem>>)
      %c0_i32_26 = arith.constant 0 : i32
      %c0_i32_27 = arith.constant 0 : i32
      %c0_i32_28 = arith.constant 0 : i32
      %49 = tpu.memref_slice %arg2[%c0_i32_27, %c0_i32_28] : memref<8x32xf32, #tpu.memory_space<any>> -> memref<8x32xf32, #tpu.memory_space<any>>
      %50 = tpu.memref_slice %arg8[%c0_i32_26] : memref<1x!tpu.dma_semaphore, #tpu.memory_space<semaphore_mem>> -> memref<1x!tpu.dma_semaphore, #tpu.memory_space<semaphore_mem>>
      %51 = tpu.memref_squeeze %50 : memref<1x!tpu.dma_semaphore, #tpu.memory_space<semaphore_mem>> -> memref<!tpu.dma_semaphore, #tpu.memory_space<semaphore_mem>>
      tpu.wait_dma2 semaphore(%51 : memref<!tpu.dma_semaphore, #tpu.memory_space<semaphore_mem>>) src(%49 : memref<8x32xf32, #tpu.memory_space<any>>) dst(%arg5 : memref<8x32xf32, #tpu.memory_space<vmem>>)
      %c0_29 = arith.constant 0 : index
      %c0_30 = arith.constant 0 : index
      %52 = vector.load %arg5[%c0_29, %c0_30] : memref<8x32xf32, #tpu.memory_space<vmem>>, vector<8x32xf32>
      %53 = arith.mulf %52, %52 : vector<8x32xf32>
      %cst_31 = arith.constant dense<0.000000e+00> : vector<8xf32>
      %54 = vector.multi_reduction <add>, %53, %cst_31 [1] : vector<8x32xf32> to vector<8xf32>
      %55 = vector.shape_cast %54 : vector<8xf32> to vector<8x1xf32>
      %cst_32 = arith.constant 1.000000e-24 : f32
      %56 = vector.broadcast %cst_32 : f32 to vector<8x1xf32>
      %57 = arith.maximumf %55, %56 : vector<8x1xf32>
      %58 = math.rsqrt %57 : vector<8x1xf32>
      %cst_33 = arith.constant 2.000000e+00 : f32
      %59 = vector.broadcast %cst_33 : f32 to vector<8x1xf32>
      %60 = arith.mulf %58, %59 : vector<8x1xf32>
      %61 = vector.broadcast %60 : vector<8x1xf32> to vector<8x32xf32>
      %62 = arith.mulf %52, %61 : vector<8x32xf32>
      %c0_34 = arith.constant 0 : index
      %c0_35 = arith.constant 0 : index
      %63 = vector.load %arg4[%c0_34, %c0_35] : memref<8x32xf32, #tpu.memory_space<vmem>>, vector<8x32xf32>
      tpu.vector_store %arg4[%c0_34, %c0_35], %62 {strides = array<i32>} : memref<8x32xf32, #tpu.memory_space<vmem>>, vector<8x32xf32>,
      %cst_36 = arith.constant 0.000000e+00 : f32
      %64 = vector.broadcast %cst_36 : f32 to vector<1x8xf32>
      %c0_37 = arith.constant 0 : index
      %c0_38 = arith.constant 0 : index
      %65 = vector.load %arg6[%c0_37, %c0_38] : memref<1x8xf32, #tpu.memory_space<vmem>>, vector<1x8xf32>
      tpu.vector_store %arg6[%c0_37, %c0_38], %64 {strides = array<i32>} : memref<1x8xf32, #tpu.memory_space<vmem>>, vector<1x8xf32>,
      %cst_39 = arith.constant 0.000000e+00 : f32
      %66 = vector.broadcast %cst_39 : f32 to vector<1x1xf32>
      %c0_40 = arith.constant 0 : index
      %c0_41 = arith.constant 0 : index
      %67 = vector.load %arg7[%c0_40, %c0_41] : memref<1x1xf32, #tpu.memory_space<vmem>>, vector<1x1xf32>
      tpu.vector_store %arg7[%c0_40, %c0_41], %66 {strides = array<i32>} : memref<1x1xf32, #tpu.memory_space<vmem>>, vector<1x1xf32>,
    } else {
    }
    %c0 = arith.constant 0 : index
    %c0_1 = arith.constant 0 : index
    %3 = vector.load %arg1[%c0, %c0_1] : memref<8x32xf32, #tpu.memory_space<vmem>>, vector<8x32xf32>
    %4 = arith.mulf %3, %3 : vector<8x32xf32>
    %cst = arith.constant dense<0.000000e+00> : vector<8xf32>
    %5 = vector.multi_reduction <add>, %4, %cst [1] : vector<8x32xf32> to vector<8xf32>
    %6 = vector.shape_cast %5 : vector<8xf32> to vector<8x1xf32>
    %cst_2 = arith.constant 1.000000e-24 : f32
    %7 = vector.broadcast %cst_2 : f32 to vector<8x1xf32>
    %8 = arith.maximumf %6, %7 : vector<8x1xf32>
    %9 = math.rsqrt %8 : vector<8x1xf32>
    %10 = vector.broadcast %9 : vector<8x1xf32> to vector<8x32xf32>
    %11 = arith.mulf %3, %10 : vector<8x32xf32>
    %c8_i32 = arith.constant 8 : i32
    %12 = arith.muli %arg0, %c8_i32 : i32
    %13 = tpu.assume_multiple %12, 8 : i32
    %14 = arith.index_cast %13 : i32 to index
    %c0_3 = arith.constant 0 : index
    %15 = vector.load %arg4[%14, %c0_3] : memref<8x32xf32, #tpu.memory_space<vmem>>, vector<8x32xf32>
    %16 = arith.mulf %11, %15 : vector<8x32xf32>
    %cst_4 = arith.constant dense<0.000000e+00> : vector<8xf32>
    %17 = vector.multi_reduction <add>, %16, %cst_4 [1] : vector<8x32xf32> to vector<8xf32>
    %18 = vector.shape_cast %17 : vector<8xf32> to vector<8x1xf32>
    %cst_5 = arith.constant 0.000000e+00 : f32
    %19 = vector.broadcast %cst_5 : f32 to vector<8x1xf32>
    %c0_6 = arith.constant 0 : index
    %c0_7 = arith.constant 0 : index
    %20 = vector.load %arg4[%c0_6, %c0_7] : memref<8x32xf32, #tpu.memory_space<vmem>>, vector<8x32xf32>
    %cst_8 = arith.constant dense<0.000000e+00> : vector<8x8xf32>
    %21 = tpu.matmul %11, %20, %cst_8 {dimension_numbers = #tpu.dot_dimension_numbers<[1], [1], [0], [0], [0, 0, 1, 0], [], []>} : vector<8x32xf32>, vector<8x32xf32>, vector<8x8xf32> -> vector<8x8xf32>
    %22 = math.exp %21 : vector<8x8xf32>
    %c0_9 = arith.constant 0 : index
    %c0_10 = arith.constant 0 : index
    %23 = vector.load %arg6[%c0_9, %c0_10] : memref<1x8xf32, #tpu.memory_space<vmem>>, vector<1x8xf32>
    %cst_11 = arith.constant dense<0.000000e+00> : vector<8xf32>
    %24 = vector.multi_reduction <add>, %22, %cst_11 [0] : vector<8x8xf32> to vector<8xf32>
    %25 = vector.shape_cast %24 : vector<8xf32> to vector<1x8xf32>
    %26 = arith.addf %23, %25 : vector<1x8xf32>
    %c0_12 = arith.constant 0 : index
    %c0_13 = arith.constant 0 : index
    %27 = vector.load %arg6[%c0_12, %c0_13] : memref<1x8xf32, #tpu.memory_space<vmem>>, vector<1x8xf32>
    tpu.vector_store %arg6[%c0_12, %c0_13], %26 {strides = array<i32>} : memref<1x8xf32, #tpu.memory_space<vmem>>, vector<1x8xf32>,
    %cst_14 = arith.constant dense<0.000000e+00> : vector<8xf32>
    %28 = vector.multi_reduction <add>, %22, %cst_14 [1] : vector<8x8xf32> to vector<8xf32>
    %29 = vector.shape_cast %28 : vector<8xf32> to vector<8x1xf32>
    %30 = arith.addf %19, %29 : vector<8x1xf32>
    %c0_15 = arith.constant 0 : index
    %c0_16 = arith.constant 0 : index
    %31 = vector.load %arg7[%c0_15, %c0_16] : memref<1x1xf32, #tpu.memory_space<vmem>>, vector<1x1xf32>
    %32 = math.log %30 : vector<8x1xf32>
    %cst_17 = arith.constant 2.000000e+00 : f32
    %33 = vector.broadcast %cst_17 : f32 to vector<8x1xf32>
    %34 = arith.mulf %33, %18 : vector<8x1xf32>
    %35 = arith.subf %32, %34 : vector<8x1xf32>
    %36 = vector.shape_cast %35 : vector<8x1xf32> to vector<1x8x1xf32>
    %cst_18 = arith.constant dense<0.000000e+00> : vector<1xf32>
    %37 = vector.multi_reduction <add>, %36, %cst_18 [1, 2] : vector<1x8x1xf32> to vector<1xf32>
    %38 = vector.shape_cast %37 : vector<1xf32> to vector<1x1x1xf32>
    %39 = vector.extract %38[0, 0, 0] : f32 from vector<1x1x1xf32>
    %40 = vector.broadcast %39 : f32 to vector<1x1xf32>
    %41 = arith.addf %31, %40 : vector<1x1xf32>
    %c0_19 = arith.constant 0 : index
    %c0_20 = arith.constant 0 : index
    %42 = vector.load %arg7[%c0_19, %c0_20] : memref<1x1xf32, #tpu.memory_space<vmem>>, vector<1x1xf32>
    tpu.vector_store %arg7[%c0_19, %c0_20], %41 {strides = array<i32>} : memref<1x1xf32, #tpu.memory_space<vmem>>, vector<1x1xf32>,
    %c0_i32_21 = arith.constant 0 : i32
    %43 = arith.cmpi eq, %arg0, %c0_i32_21 : i32
    %44 = arith.extui %43 : i1 to i32
    %c0_i32_22 = arith.constant 0 : i32
    %45 = arith.cmpi ne, %44, %c0_i32_22 : i32
    scf.if %45 {
      %c0_23 = arith.constant 0 : index
      %c0_24 = arith.constant 0 : index
      %46 = vector.load %arg7[%c0_23, %c0_24] : memref<1x1xf32, #tpu.memory_space<vmem>>, vector<1x1xf32>
      %47 = vector.shape_cast %46 : vector<1x1xf32> to vector<1x1x1xf32>
      %cst_25 = arith.constant dense<0.000000e+00> : vector<1xf32>
      %48 = vector.multi_reduction <add>, %47, %cst_25 [1, 2] : vector<1x1x1xf32> to vector<1xf32>
      %49 = vector.shape_cast %48 : vector<1xf32> to vector<1x1x1xf32>
      %50 = vector.extract %49[0, 0, 0] : f32 from vector<1x1x1xf32>
      %c0_26 = arith.constant 0 : index
      %c0_27 = arith.constant 0 : index
      %51 = vector.load %arg6[%c0_26, %c0_27] : memref<1x8xf32, #tpu.memory_space<vmem>>, vector<1x8xf32>
      %52 = math.log %51 : vector<1x8xf32>
      %53 = vector.shape_cast %52 : vector<1x8xf32> to vector<1x1x8xf32>
      %cst_28 = arith.constant dense<0.000000e+00> : vector<1xf32>
      %54 = vector.multi_reduction <add>, %53, %cst_28 [1, 2] : vector<1x1x8xf32> to vector<1xf32>
      %55 = vector.shape_cast %54 : vector<1xf32> to vector<1x1x1xf32>
      %56 = vector.extract %55[0, 0, 0] : f32 from vector<1x1x1xf32>
      %57 = arith.addf %50, %56 : f32
      %cst_29 = arith.constant 1.600000e+01 : f32
      %58 = arith.divf %57, %cst_29 : f32
      %c0_30 = arith.constant 0 : index
      %59 = memref.load %arg3[%c0_30] : memref<1xf32, #tpu.memory_space<smem>>
      memref.store %58, %arg3[%c0_30] : memref<1xf32, #tpu.memory_space<smem>>
    } else {
    }
    return
  }
  func.func @transform_0(%arg0: i32) -> (i32, i32) {
    %c0_i32 = arith.constant 0 : i32
    %c0_i32_0 = arith.constant 0 : i32
    return %arg0, %c0_i32 : i32, i32
  }
  func.func @transform_2(%arg0: i32) -> i32 {
    %c0_i32 = arith.constant 0 : i32
    %c0_i32_0 = arith.constant 0 : i32
    return %c0_i32 : i32
  }
}

</mosaic_0001>

<llo_original>
// kernel: tpu_custom_call.1
$region0: #{tpu_custom_call.1}
  #allocation0 [shape = 'u32[]', space=smem, size = 0x4, offset = 0x4, fixed_abs, tag = 'smem constant byte address 0x4 - core index']
  #allocation1 [shape = 'u32[144,128]{1,0:T(1,128)}', space=vmem, size = 0x12000, scoped, tag = 'internal scratch']
  #allocation2 [shape = 'f32[8,32]{1,0:T(8,128)}', space=vmem, size = 0x1000, scoped, tag = 'scratch operand']
  #allocation3 [shape = 'f32[8,32]{1,0:T(8,128)}', space=vmem, size = 0x1000, scoped, tag = 'scratch operand']
  #allocation4 [shape = 'f32[1,8]{1,0:T(1,128)}', space=vmem, size = 0x200, scoped, tag = 'scratch operand']
  #allocation5 [shape = 'f32[1,1]{1,0:T(1,128)}', space=vmem, size = 0x200, scoped, tag = 'scratch operand']
  #allocation6 [shape = 's32[1]{0}', space=sflag, size = 0x4, scoped, tag = 'scratch operand']
  #allocation11 [shape = 's32[]', space=sflag, size = 0x4, offset = 0, fixed_abs, tag = 'sflag constant byte address 0x0 - dummy sync flag']
  #allocation12 [shape = 's32[]', space=sflag, size = 0x4, offset = 0, fixed_abs, tag = 'sflag constant byte address 0x0 - dummy sync flag']
  #allocation13 [shape = 'u32[]', space=smem, size = 0x4, offset = 0x44, fixed_abs, tag = 'smem constant byte address 0x44 - assertion arg 0']
  #allocation14 [shape = 'u32[]', space=smem, size = 0x4, offset = 0x48, fixed_abs, tag = 'smem constant byte address 0x48 - assertion arg 1']
  %s0 = inlined_call_operand.hbm [shape: f32[8,32], index: 0, kind: input, shape index: {}]
  %s1 = inlined_call_operand.hbm [shape: f32[8,32], index: 1, kind: input, shape index: {}]
  %s2 = inlined_call_operand.hbm [shape: f32[1], index: 2, kind: output, shape index: {}]
  %s3 = sld [smem:[#allocation0]]
  $region30: #{tpu_custom_call.1} parent=0
    _
  %s5 = ssub.s32 1, %s3
  %s6 = scalar_select 0, %s5, %s3
  $region1: #{tpu_custom_call.1} parent=0
    #allocation7 [shape = 'u8[4096]{0}', space=vmem, size = 0x1000, scoped, tag = 'input window, operand 0, single buffered']
    #allocation8 [shape = 's32[1]{0}', space=sflag, size = 0x4, scoped, tag = 'scoped memory for tpu_custom_call.1']
    #allocation9 [shape = 's32[1]{0}', space=sflag, size = 0x4, scoped, tag = 'scoped memory for tpu_custom_call.1']
    #allocation10 [shape = 'u8[512]{0}', space=smem, size = 0x200, scoped, tag = 'output window, operand 0, single buffered']
    %7 = vsyncpa [#allocation8], 0
    %8 = vsyncpa [#allocation9], 0
    // Predicated region
    $region2: #{tpu_custom_call.1} parent=1 // pred_check
      _
    $region3: #{tpu_custom_call.1} parent=1 // pred_check_branch
      %10 = sbr.rel (0) target = $region5
    $region4: #{tpu_custom_call.1} parent=1 // pred_region
      %s12 = ssub.s32 128, 128
      %13 = vsyncadd [#allocation8], %s12
      %s15 = sshll.u32 [#allocation7], 4
      %s16 = int_to_ptr.vmem [resolvable:$true] %s15
      %18 = dma.hbm_to_vmem [thread:$0]  %s0, 128, %s16, [#allocation8]
    $region5: #{tpu_custom_call.1} parent=1 // pred_fallthru
      _
    // Predicated region
    $region6: #{tpu_custom_call.1} parent=1 // pred_check
      _
    $region7: #{tpu_custom_call.1} parent=1 // pred_check_branch
      %20 = sbr.rel (0) target = $region9
    $region8: #{tpu_custom_call.1} parent=1 // pred_region
      %21 = dma.done [#allocation8], 128
    $region9: #{tpu_custom_call.1} parent=1 // pred_fallthru
      _
    %p22 = scmp.eq.s32.totalorder 0, 0
    // Predicated region
    $region10: #{tpu_custom_call.1} parent=1 // pred_check
      %p23 = pneg %p22
    $region11: #{tpu_custom_call.1} parent=1 // pred_check_branch
      %25 = sbr.rel (%p23) target = $region13
    $region12: #{tpu_custom_call.1} parent=1 // pred_region
      // Predicated region
      $region14: #{tpu_custom_call.1} parent=12 // pred_check
        _
      $region15: #{tpu_custom_call.1} parent=12 // pred_check_branch
        %27 = sbr.rel target = $region17
      $region16: #{tpu_custom_call.1} parent=12 // pred_region
        %28 = sst [smem:[#allocation13]] [#allocation12]
        %29 = sst [smem:[#allocation14]] [#allocation11]
      $region17: #{tpu_custom_call.1} parent=12 // pred_fallthru
        _
      %31 = shalt.err (0)
      %s33 = sshll.u32 [#allocation3], 4
      %s34 = int_to_ptr.vmem [resolvable:$true] %s33
      %36 = dma.hbm_to_vmem [thread:$0]  %s1, 128, %s34, [#allocation6]
      %s37 = smul.u32 8, 1
      %s38 = sshll.u32 %s37, 4
      %39 = dma.done [#allocation6], %s38
      %v40 = vld [vmem:[#allocation3] sm:$0xff]
      %v41 = vmul.f32 %v40, %v40
      %vm42 = vcmask 261120
      %v43 = vsel %vm42, %v41, 0.0
      %44 = vadd.xlane.f32.xlu0 %v43
      %v45 = vpop.xlane.xlu0 %44
      %v46 = vmax.f32 %v45, 1e-24
      %v47 = vrsqrt.pop %v46
      %v48 = vmul.f32 %v47, 2.0
      %v49 = vmul.f32 %v40, %v48
      %50 = vst.msk [vmem:[#allocation2] sm:$0xff] %vm42, %v49
      %vm51 = vcmask 57344
      %52 = vst.msk [vmem:[#allocation4] sm:$0x1] %vm51, 0.0
      %vm53 = vcmask 0
      %54 = vst.msk [vmem:[#allocation5] sm:$0x1] %vm53, 0.0
    $region13: #{tpu_custom_call.1} parent=1 // pred_fallthru
      _
    %v55 = vld [vmem:[#allocation7] sm:$0xff]
    %v56 = vmul.f32 %v55, %v55
    %vm57 = vcmask 261120
    %v58 = vsel %vm57, %v56, 0.0
    %59 = vadd.xlane.f32.xlu0 %v58
    %v60 = vpop.xlane.xlu0 %59
    %v61 = vmax.f32 %v60, 1e-24
    %v62 = vrsqrt.pop %v61
    %v63 = vmul.f32 %v55, %v62
    %s64 = smul.u32 0, 8
    %s65 = scalar_lea.vmem [#allocation2], %s64
    %v66 = vld [vmem:[%s65] sm:$0xff]
    %v67 = vmul.f32 %v63, %v66
    %v68 = vsel %vm57, %v67, 0.0
    %69 = vadd.xlane.f32.xlu0 %v68
    %v70 = vpop.xlane.xlu0 %69
    %v71 = vld [vmem:[#allocation2] sm:$0xff]
    %v73 = vsel %vm57, %v63, 0
    %v76 = vsel %vm57, %v71, 0
    %78 = vmatprep.subr.mxu0 0.0
    %79 = vmatpush1.xpose.msra.mxu0 %v76
    %80 = vmatprep.subr.mxu0 0.0
    %81 = vmatpush1.xpose.msra.mxu0 0.0
    %82 = vmatprep.subr.mxu0 0.0
    %83 = vmatpush1.xpose.msra.mxu0 0.0
    %84 = vmatprep.subr.mxu0 0.0
    %85 = vmatpush1.xpose.msra.mxu0 0.0
    %86 = vmatprep.subr.mxu0 0.0
    %87 = vmatpush1.xpose.msra.mxu0 0.0
    %88 = vmatprep.subr.mxu0 0.0
    %89 = vmatpush1.xpose.msra.mxu0 0.0
    %90 = vmatprep.subr.mxu0 0.0
    %91 = vmatpush1.xpose.msra.mxu0 0.0
    %92 = vmatprep.subr.mxu0 0.0
    %93 = vmatpush1.xpose.msra.mxu0 0.0
    %94 = vmatprep.subr.mxu0 0.0
    %95 = vmatpush1.xpose.msra.mxu0 0.0
    %96 = vmatprep.subr.mxu0 0.0
    %97 = vmatpush1.xpose.msra.mxu0 0.0
    %98 = vmatprep.subr.mxu0 0.0
    %99 = vmatpush1.xpose.msra.mxu0 0.0
    %100 = vmatprep.subr.mxu0 0.0
    %101 = vmatpush1.xpose.msra.mxu0 0.0
    %102 = vmatprep.subr.mxu0 0.0
    %103 = vmatpush1.xpose.msra.mxu0 0.0
    %104 = vmatprep.subr.mxu0 0.0
    %105 = vmatpush1.xpose.msra.mxu0 0.0
    %106 = vmatprep.subr.mxu0 0.0
    %107 = vmatpush1.xpose.msra.mxu0 0.0
    %108 = vmatprep.subr.mxu0 0.0
    %109 = vmatpush1.xpose.msra.mxu0 0.0
    %110 = vmatprep.subr.mxu0 0.0
    %111 = vmatpush1.xpose.msra.mxu0 0.0
    %112 = vmatprep.subr.mxu0 0.0
    %113 = vmatpush1.xpose.msra.mxu0 0.0
    %114 = vmatprep.subr.mxu0 0.0
    %115 = vmatpush1.xpose.msra.mxu0 0.0
    %116 = vmatprep.subr.mxu0 0.0
    %117 = vmatpush1.xpose.msra.mxu0 0.0
    %118 = vmatprep.subr.mxu0 0.0
    %119 = vmatpush1.xpose.msra.mxu0 0.0
    %120 = vmatprep.subr.mxu0 0.0
    %121 = vmatpush1.xpose.msra.mxu0 0.0
    %122 = vmatprep.subr.mxu0 0.0
    %123 = vmatpush1.xpose.msra.mxu0 0.0
    %124 = vmatprep.subr.mxu0 0.0
    %125 = vmatpush1.xpose.msra.mxu0 0.0
    %126 = vmatprep.subr.mxu0 0.0
    %127 = vmatpush1.xpose.msra.mxu0 0.0
    %128 = vmatprep.subr.mxu0 0.0
    %129 = vmatpush1.xpose.msra.mxu0 0.0
    %130 = vmatprep.subr.mxu0 0.0
    %131 = vmatpush1.xpose.msra.mxu0 0.0
    %132 = vmatprep.subr.mxu0 0.0
    %133 = vmatpush1.xpose.msra.mxu0 0.0
    %134 = vmatprep.subr.mxu0 0.0
    %135 = vmatpush1.xpose.msra.mxu0 0.0
    %136 = vmatprep.subr.mxu0 0.0
    %137 = vmatpush1.xpose.msra.mxu0 0.0
    %138 = vmatprep.subr.mxu0 0.0
    %139 = vmatpush1.xpose.msra.mxu0 0.0
    %140 = vmatprep.subr.mxu0 0.0
    %141 = vmatpush1.xpose.msra.mxu0 0.0
    %142 = vmatprep.mubr.f32.mxu0 0.0
    %143 = vmatmul.mubr.f32.gmra.mrb[0].mxu0 %v73
    %v144 = vpop.f32.mrb[0].mxu0
    %v145 = vadd.f32 0.0, %v144
    %v146 = vpop.f32.mrb[0].mxu0
    %147 = vdwg.mxu0
    %v148 = vmul.f32 %v145, 1.442695
    %v149 = vpow.pop %v148
    %v150 = vld [vmem:[#allocation4] sm:$0x1]
    %vm151 = vcmask 64512
    %v152 = vsel %vm151, %v149, 0.0
    %v153 = vrot.slane %v152, 4
    %v154 = vadd.f32 %v152, %v153
    %v155 = vrot.slane %v154, 2
    %v156 = vadd.f32 %v154, %v155
    %v157 = vrot.slane %v156, 1
    %v158 = vadd.f32 %v156, %v157
    %v159 = vadd.f32 %v150, %v158
    %vm160 = vcmask 57344
    %161 = vst.msk [vmem:[#allocation4] sm:$0x1] %vm160, %v159
    %162 = vadd.xlane.f32.xlu0 %v152
    %v163 = vpop.xlane.xlu0 %162
    %v164 = vadd.f32 %v163, 0.0
    %v165 = vld [vmem:[#allocation5] sm:$0x1]
    %v166 = vlog2.pop %v164
    %v167 = vmul.f32 %v166, 0.6931472
    %v168 = vmul.f32 %v70, 2.0
    %v169 = vsub.f32 %v167, %v168
    %vm170 = vcmask 7168
    %v171 = vsel %vm170, %v169, 0.0
    %172 = vadd.xlane.f32.xlu0 %v171
    %v173 = vpop.xlane.xlu0 %172
    %v174 = vrot.slane %v173, 4
    %v175 = vadd.f32 %v173, %v174
    %v176 = vrot.slane %v175, 2
    %v177 = vadd.f32 %v175, %v176
    %v178 = vrot.slane %v177, 1
    %v179 = vadd.f32 %v177, %v178
    %s180 = vtos %v179
    %v181 = vstv %s180
    %v182 = vadd.f32 %v165, %v181
    %vm183 = vcmask 0
    %184 = vst.msk [vmem:[#allocation5] sm:$0x1] %vm183, %v182
    // Predicated region
    $region18: #{tpu_custom_call.1} parent=1 // pred_check
      %p185 = pneg %p22
    $region19: #{tpu_custom_call.1} parent=1 // pred_check_branch
      %187 = sbr.rel (%p185) target = $region21
    $region20: #{tpu_custom_call.1} parent=1 // pred_region
      %v188 = vld [vmem:[#allocation5] sm:$0x1]
      %v189 = vadd.f32 %v188, 0.0
      %s190 = vtos %v189
      %v191 = vld [vmem:[#allocation4] sm:$0x1]
      %v192 = vlog2.pop %v191
      %v193 = vmul.f32 %v192, 0.6931472
      %v194 = vsel %vm160, %v193, 0.0
      %195 = vadd.xlane.f32.xlu0 %v194
      %v196 = vpop.xlane.xlu0 %195
      %v197 = vrot.slane %v196, 4
      %v198 = vadd.f32 %v196, %v197
      %v199 = vrot.slane %v198, 2
      %v200 = vadd.f32 %v198, %v199
      %v201 = vrot.slane %v200, 1
      %v202 = vadd.f32 %v200, %v201
      %s203 = vtos %v202
      %s204 = sadd.f32 %s190, %s203
      %v205 = vrcp.pop 16.0
      %s206 = vtos %v205
      %s207 = smul.f32 %s204, %s206
      %s208 = scalar_lea.smem [#allocation10], 0
      %209 = sst [smem:[%s208]] %s207
    $region21: #{tpu_custom_call.1} parent=1 // pred_fallthru
      _
    // Predicated region
    $region22: #{tpu_custom_call.1} parent=1 // pred_check
      _
    $region23: #{tpu_custom_call.1} parent=1 // pred_check_branch
      %211 = sbr.rel (0) target = $region25
    $region24: #{tpu_custom_call.1} parent=1 // pred_region
      %s213 = ssub.s32 16, 16
      %214 = vsyncadd [#allocation9], %s213
      %217 = dma.smem_to_hbm [#allocation10], 16, %s2, [#allocation9]
    $region25: #{tpu_custom_call.1} parent=1 // pred_fallthru
      _
    // Predicated region
    $region26: #{tpu_custom_call.1} parent=1 // pred_check
      _
    $region27: #{tpu_custom_call.1} parent=1 // pred_check_branch
      %219 = sbr.rel (0) target = $region29
    $region28: #{tpu_custom_call.1} parent=1 // pred_region
      %220 = dma.done [#allocation9], 16
    $region29: #{tpu_custom_call.1} parent=1 // pred_fallthru
      _
    %221 = sfence
    %222 = vsyncpa [#allocation8], 1
    %223 = vsyncpa [#allocation9], 1
  %224 = vsyncmov [#allocation6]
  %s225 = vpop.sfrf %224
  %p226 = scmp.eq.s32.totalorder %s225, 0
  %p227 = pneg %p226
  %229 = shalt.err (%p227)

</llo_original>
